<compile_context>
chip_gen: v6e
topology: v6e:2x2x1
jax: 0.10.0
libtpu: 0.0.40
codegen_flags: <defaults>
</compile_context>

<pallas_src>
import functools

import jax
import jax.numpy as jnp
import numpy as np
from jax import lax
from jax.experimental import pallas as pl
from jax.experimental.pallas import tpu as pltpu


def _conv_bn_relu_single_k_kernel(p_ref, w_ref, b_ref, o_ref):
    # Whole K fits one tile: out = relu(P @ W + b), no accumulator scratch.
    # p_ref: [TM, Kp] bf16, w_ref: [Kp, TN] bf16, b_ref: [1, TN] f32.
    y = jnp.dot(p_ref[...], w_ref[...], preferred_element_type=jnp.float32)
    y = y + b_ref[...]                               # f32 epilogue (BN bias)
    o_ref[...] = jnp.maximum(y, 0.0).astype(o_ref.dtype)


def _conv_bn_relu_multi_k_kernel(p_ref, w_ref, b_ref, o_ref, acc_ref):
    # K split across grid axis 2; f32 accumulator resident in VMEM.
    k = pl.program_id(2)
    partial = jnp.dot(p_ref[...], w_ref[...],
                      preferred_element_type=jnp.float32)

    @pl.when(k == 0)
    def _():
        acc_ref[...] = partial          # write first partial, no zero-fill

    @pl.when(k != 0)
    def _():
        acc_ref[...] += partial

    @pl.when(k == pl.num_programs(2) - 1)
    def _():
        y = acc_ref[...] + b_ref[...]
        o_ref[...] = jnp.maximum(y, 0.0).astype(o_ref.dtype)


def _im2col_nchw(x, kh, kw, stride, padding):
    """x: [N, C, H, W] -> patches [N*OH*OW, C*KH*KW] (C-major, matching OIHW)."""
    n, c, h, w = x.shape
    xp = jnp.pad(x, ((0, 0), (0, 0), (padding, padding), (padding, padding)))
    oh = (h + 2 * padding - kh) // stride + 1
    ow = (w + 2 * padding - kw) // stride + 1
    slices = []
    for i in range(kh):
        for j in range(kw):
            sl = xp[:, :, i:i + (oh - 1) * stride + 1:stride,
                          j:j + (ow - 1) * stride + 1:stride]  # [N, C, OH, OW]
            slices.append(sl)
    # [KH*KW, N, C, OH, OW] -> [N, OH, OW, C, KH*KW] -> [N*OH*OW, C*KH*KW]
    stacked = jnp.stack(slices, axis=0)
    stacked = jnp.transpose(stacked, (1, 3, 4, 2, 0))
    patches = stacked.reshape(n * oh * ow, c * kh * kw)
    return patches, oh, ow


def _round_up(v, m):
    return ((v + m - 1) // m) * m


@functools.partial(
    jax.jit,
    static_argnames=("stride", "padding", "out_dtype", "tm", "tn", "tk"))
def basic_conv_forward(x, weight, gamma, beta, running_mean, running_var,
                       *, stride=1, padding=0, eps=1e-5,
                       out_dtype=jnp.bfloat16, tm=None, tn=None, tk=None):
    """BasicConv forward. x: [N, Cin, H, W] NCHW, weight: [Cout, Cin, KH, KW]."""
    n, cin, h, w = x.shape
    cout, _, kh, kw = weight.shape

    # Fold BN (eval semantics) into a per-channel scale (into weight columns)
    # and bias (added in the kernel epilogue). Math in f32, storage in bf16.
    inv_std = gamma * lax.rsqrt(running_var + eps)                  # [Cout]
    w_mat = (weight.reshape(cout, cin * kh * kw).T
             * inv_std[None, :]).astype(jnp.bfloat16)               # [K, Cout]
    bias = (beta - running_mean * inv_std).astype(jnp.float32)      # [Cout]

    # im2col built directly in bf16 (halves patch-matrix HBM traffic vs f32).
    patches, oh, ow = _im2col_nchw(x.astype(jnp.bfloat16), kh, kw,
                                   stride, padding)                 # [M, K]
    m, k = patches.shape

    # ---- adaptive tile selection ------------------------------------------
    cp = _round_up(cout, 128)              # lane-dense output (unmasked vst)
    if tn is None:
        tn = 256 if cp % 256 == 0 else 128
    cp = _round_up(cp, tn)
    n_j = cp // tn

    single_k = (k <= 1024) if tk is None else (k <= tk)
    if single_k:
        # Full-extent K block is exempt from the 128-lane rule: pad only to
        # bf16 sublane-packing granularity (16), not all the way to 128.
        kp = _round_up(k, 16)
        tk = kp
    else:
        tk = 256 if tk is None else tk
        kp = _round_up(k, tk)

    if tm is None:
        tm = 512
        # Keep product of the two "parallel" grid axes >= 2 (v7x has 2 TCs)
        # and avoid a fully-padding M tile.
        while tm > 128 and ((_round_up(m, tm) // tm) * n_j < 2
                            or _round_up(m, tm) - m >= tm):
            tm //= 2
    mp = _round_up(m, tm)

    p_pad = jnp.pad(patches, ((0, mp - m), (0, kp - k)))            # bf16
    w_pad = jnp.pad(w_mat, ((0, kp - k), (0, cp - cout)))           # bf16
    b_pad = jnp.pad(bias, (0, cp - cout)).reshape(1, cp)            # f32

    out_bytes = np.dtype(out_dtype).itemsize
    # Double-buffered inputs/outputs (+ f32 accumulator on the multi-K path),
    # capped at 48 MiB so the same config is safe on v7x's 64 MiB VMEM.
    footprint = 2 * (tm * tk * 2 + tk * tn * 2 + tn * 4)
    footprint += 2 * tm * tn * out_bytes
    if not single_k:
        footprint += tm * tn * 4
    vmem_limit = int(min(48 * 1024 * 1024,
                         max(2 * footprint, 16 * 1024 * 1024)))

    flops = 2 * mp * kp * cp
    bytes_accessed = (mp * kp * 2 + kp * cp * 2 + cp * 4 + mp * cp * out_bytes)
    cost = pl.CostEstimate(flops=flops, bytes_accessed=bytes_accessed,
                           transcendentals=0)

    if single_k:
        out_flat = pl.pallas_call(
            _conv_bn_relu_single_k_kernel,
            out_shape=jax.ShapeDtypeStruct((mp, cp), out_dtype),
            grid_spec=pltpu.PrefetchScalarGridSpec(
                num_scalar_prefetch=0,
                grid=(mp // tm, cp // tn),
                in_specs=[
                    pl.BlockSpec((tm, tk), lambda i, j: (i, 0)),
                    pl.BlockSpec((tk, tn), lambda i, j: (0, j)),
                    pl.BlockSpec((1, tn), lambda i, j: (0, j)),
                ],
                out_specs=pl.BlockSpec((tm, tn), lambda i, j: (i, j)),
            ),
            compiler_params=pltpu.CompilerParams(
                dimension_semantics=("parallel", "parallel"),
                vmem_limit_bytes=vmem_limit,
            ),
            cost_estimate=cost,
        )(p_pad, w_pad, b_pad)
    else:
        out_flat = pl.pallas_call(
            _conv_bn_relu_multi_k_kernel,
            out_shape=jax.ShapeDtypeStruct((mp, cp), out_dtype),
            grid_spec=pltpu.PrefetchScalarGridSpec(
                num_scalar_prefetch=0,
                grid=(mp // tm, cp // tn, kp // tk),
                in_specs=[
                    pl.BlockSpec((tm, tk), lambda i, j, kk: (i, kk)),
                    pl.BlockSpec((tk, tn), lambda i, j, kk: (kk, j)),
                    pl.BlockSpec((1, tn), lambda i, j, kk: (0, j)),
                ],
                out_specs=pl.BlockSpec((tm, tn), lambda i, j, kk: (i, j)),
                scratch_shapes=[pltpu.VMEM((tm, tn), jnp.float32)],
            ),
            compiler_params=pltpu.CompilerParams(
                dimension_semantics=("parallel", "parallel", "arbitrary"),
                vmem_limit_bytes=vmem_limit,
            ),
            cost_estimate=cost,
        )(p_pad, w_pad, b_pad)

    # De-pad + [M, Cout] -> NCHW (module semantics). Under jit the slice /
    # reshape / transpose fuse into a single copy; downstream consumers that
    # accept the flat [M, Cout] layout can use out_flat[:m, :cout] directly.
    out = out_flat[:m, :cout].reshape(n, oh, ow, cout).transpose(0, 3, 1, 2)
    return out


def _reference(x, weight, gamma, beta, running_mean, running_var,
               *, stride, padding, eps=1e-5):
    y = lax.conv_general_dilated(
        x, weight, window_strides=(stride, stride),
        padding=((padding, padding), (padding, padding)),
        dimension_numbers=("NCHW", "OIHW", "NCHW"))
    s = (gamma / jnp.sqrt(running_var + eps)).reshape(1, -1, 1, 1)
    b = (beta - running_mean * gamma / jnp.sqrt(running_var + eps)).reshape(1, -1, 1, 1)
    return jnp.maximum(y * s + b, 0.0)


if __name__ == "__main__":
    # BasicConv(in_planes=4, out_planes=8, kernel_size=3, stride=1, padding=1,
    #           relu=True, bn=True, bias=False)
    key = jax.random.PRNGKey(0)
    k_x, k_w, k_g, k_b, k_m, k_v = jax.random.split(key, 6)

    N, CIN, H, W = 2, 4, 16, 16
    COUT, KH, KW = 8, 3, 3
    STRIDE, PADDING = 1, 1

    x = jax.random.normal(k_x, (N, CIN, H, W), dtype=jnp.float32)
    weight = 0.1 * jax.random.normal(k_w, (COUT, CIN, KH, KW), dtype=jnp.float32)
    gamma = 1.0 + 0.1 * jax.random.normal(k_g, (COUT,), dtype=jnp.float32)
    beta = 0.1 * jax.random.normal(k_b, (COUT,), dtype=jnp.float32)
    running_mean = 0.1 * jax.random.normal(k_m, (COUT,), dtype=jnp.float32)
    running_var = 1.0 + 0.1 * jnp.abs(jax.random.normal(k_v, (COUT,), dtype=jnp.float32))

    out = basic_conv_forward(x, weight, gamma, beta, running_mean, running_var,
                             stride=STRIDE, padding=PADDING)
    out = jax.block_until_ready(out)

    ref = _reference(x, weight, gamma, beta, running_mean, running_var,
                     stride=STRIDE, padding=PADDING)
    assert out.shape == (N, COUT, H, W), out.shape
    # Loosened tolerance: MXU inputs and the kernel output are bf16
    # (accumulation + epilogue stay f32 via preferred_element_type).
    np.testing.assert_allclose(np.asarray(out.astype(jnp.float32)),
                               np.asarray(ref), rtol=5e-2, atol=5e-2)

    print("KERNEL_OK")
</pallas_src>

<mosaic_0001>
module attributes {stable_mosaic.version = 11 : i64} {
  func.func @_conv_bn_relu_single_k_kernel(%arg0: i32, %arg1: i32, %arg2: memref<256x48xbf16, #tpu.memory_space<vmem>>, %arg3: memref<48x128xbf16, #tpu.memory_space<vmem>>, %arg4: memref<1x128xf32, #tpu.memory_space<vmem>>, %arg5: memref<256x128xbf16, #tpu.memory_space<vmem>>) attributes {dimension_semantics = [#tpu.dimension_semantics<parallel>, #tpu.dimension_semantics<parallel>], iteration_bounds = array<i64: 2, 1>, scalar_prefetch = 0 : i64, scratch_operands = 0 : i64, tpu.core_type = #tpu.core_type<tc>, window_params = [{transform_indices = @transform_0, window_bounds = array<i64: 256, 48>}, {transform_indices = @transform_1, window_bounds = array<i64: 48, 128>}, {transform_indices = @transform_2, window_bounds = array<i64: 1, 128>}, {transform_indices = @transform_3, window_bounds = array<i64: 256, 128>}]} {
    %c0 = arith.constant 0 : index
    %c0_0 = arith.constant 0 : index
    %0 = vector.load %arg2[%c0, %c0_0] : memref<256x48xbf16, #tpu.memory_space<vmem>>, vector<256x48xbf16>
    %c0_1 = arith.constant 0 : index
    %c0_2 = arith.constant 0 : index
    %1 = vector.load %arg3[%c0_1, %c0_2] : memref<48x128xbf16, #tpu.memory_space<vmem>>, vector<48x128xbf16>
    %cst = arith.constant dense<0.000000e+00> : vector<256x128xf32>
    %2 = tpu.matmul %0, %1, %cst {dimension_numbers = #tpu.dot_dimension_numbers<[1], [0], [0], [1], [0, 0, 1, 1], [], []>} : vector<256x48xbf16>, vector<48x128xbf16>, vector<256x128xf32> -> vector<256x128xf32>
    %c0_3 = arith.constant 0 : index
    %c0_4 = arith.constant 0 : index
    %3 = vector.load %arg4[%c0_3, %c0_4] : memref<1x128xf32, #tpu.memory_space<vmem>>, vector<1x128xf32>
    %4 = vector.broadcast %3 : vector<1x128xf32> to vector<256x128xf32>
    %5 = arith.addf %2, %4 : vector<256x128xf32>
    %cst_5 = arith.constant 0.000000e+00 : f32
    %6 = vector.broadcast %cst_5 : f32 to vector<256x128xf32>
    %7 = arith.maximumf %5, %6 : vector<256x128xf32>
    %8 = arith.truncf %7 : vector<256x128xf32> to vector<256x128xbf16>
    %c0_6 = arith.constant 0 : index
    %c0_7 = arith.constant 0 : index
    %9 = vector.load %arg5[%c0_6, %c0_7] : memref<256x128xbf16, #tpu.memory_space<vmem>>, vector<256x128xbf16>
    tpu.vector_store %arg5[%c0_6, %c0_7], %8 {strides = array<i32>} : memref<256x128xbf16, #tpu.memory_space<vmem>>, vector<256x128xbf16>,
    return
  }
  func.func @transform_0(%arg0: i32, %arg1: i32) -> (i32, i32) {
    %c0_i32 = arith.constant 0 : i32
    %c0_i32_0 = arith.constant 0 : i32
    return %arg0, %c0_i32 : i32, i32
  }
  func.func @transform_1(%arg0: i32, %arg1: i32) -> (i32, i32) {
    %c0_i32 = arith.constant 0 : i32
    %c0_i32_0 = arith.constant 0 : i32
    return %c0_i32, %arg1 : i32, i32
  }
  func.func @transform_2(%arg0: i32, %arg1: i32) -> (i32, i32) {
    %c0_i32 = arith.constant 0 : i32
    %c0_i32_0 = arith.constant 0 : i32
    return %c0_i32, %arg1 : i32, i32
  }
  func.func @transform_3(%arg0: i32, %arg1: i32) -> (i32, i32) {
    %c0_i32 = arith.constant 0 : i32
    return %arg0, %arg1 : i32, i32
  }
}

</mosaic_0001>

<llo_original>
// kernel: basic_conv_forward.1
$region0: #{basic_conv_forward.1}
  #allocation0 [shape = 'u32[]', space=smem, size = 0x4, offset = 0x4, fixed_abs, tag = 'smem constant byte address 0x4 - core index']
  #allocation1 [shape = 'u32[144,128]{1,0:T(1,128)}', space=vmem, size = 0x12000, scoped, tag = 'internal scratch']
  %s0 = inlined_call_operand.vmem [shape: bf16[512,48], index: 0, kind: input, shape index: {}]
  %s1 = inlined_call_operand.vmem [shape: bf16[48,128], index: 1, kind: input, shape index: {}]
  %s2 = inlined_call_operand.vmem [shape: f32[1,128], index: 2, kind: input, shape index: {}]
  %s3 = inlined_call_operand.vmem [shape: bf16[512,128], index: 3, kind: output, shape index: {}]
  %s4 = sld [smem:[#allocation0]]
  $region45: #{basic_conv_forward.1} parent=0
    _
  %s6 = ssub.s32 1, %s4
  %s7 = scalar_select 0, %s6, %s4
  loop: start=0, step=1, limit=4
  $region2: #{basic_conv_forward.1} parent=0 // loop_pre_header
    _
  $region3: #{basic_conv_forward.1} parent=0 // loop_header
    %s9 = sphi 0, %s13
    %p10 = scmp.ge.s32.totalorder %s9, 4
    %s16 = sphi 0, %s28
    %s17 = sphi 0, %s24
    %s18 = sphi 0, %s16
    %s19 = sphi 0, %s17
    %s20 = sphi 0, %s18
    %s21 = sphi 0, %s19
    %s31 = sphi 0, %s33
    %s34 = sphi 0, %s31
    %s35 = sphi 0, %s34
    %s51 = sphi 0, %s35
    %s57 = sphi 0, %s59
    %s60 = sphi 0, %s57
    %s61 = sphi 0, %s60
    %s77 = sphi 0, %s61
    %s83 = sphi 0, %s85
    %s86 = sphi 0, %s83
    %s87 = sphi 0, %s86
    %s103 = sphi 0, %s87
    %s111 = sphi 0, %s113
    %s114 = sphi 0, %s111
    %s115 = sphi 0, %s114
    %s131 = sphi 0, %s115
  $region4: #{basic_conv_forward.1} parent=0 // loop_header_branch
    %12 = sbr.rel (%p10) target = $region8
  $region5: #{basic_conv_forward.1} parent=0 // loop_body
    %s14 = ssub.s32 %s9, 1
    %s15 = ssub.s32 %s9, 2
    %s22 = sadd.s32 1, %s17
    %p23 = scmp.ge.s32.totalorder %s22, 1
    %s24 = scalar_select %p23, 0, %s22
    %s25 = sadd.s32 1, %s16
    %s26 = scalar_select %p23, %s25, %s16
    %p27 = scmp.ge.s32.totalorder %s26, 2
    %s28 = scalar_select %p27, 0, %s26
    %s29 = ssub.s32 %s16, %s28
    %p30 = scmp.eq.s32.totalorder %s29, 0
    %s32 = sadd.s32 %s31, 1
    %s33 = scalar_select %p30, %s31, %s32
    %p36 = pneg %p30
    %p37 = scmp.eq.s32.totalorder %s9, 1
    %p38 = por %p36, %p37
    %p39 = scmp.ne.s32.totalorder %s31, %s34
    %p40 = scmp.eq.s32.totalorder %s9, 0
    %p41 = por %p39, %p40
    %p42 = scmp.ne.s32.totalorder %s31, %s34
    %p43 = scmp.eq.s32.totalorder %s14, 1
    %p44 = por %p42, %p43
    %p45 = scmp.ne.s32.totalorder %s34, %s35
    %p46 = scmp.eq.s32.totalorder %s14, 0
    %p47 = por %p45, %p46
    %p48 = scmp.ne.s32.totalorder %s34, %s35
    %p49 = scmp.eq.s32.totalorder %s15, 1
    %p50 = por %p48, %p49
    %p52 = scmp.ne.s32.totalorder %s35, %s51
    %p53 = scmp.eq.s32.totalorder %s15, 0
    %p54 = por %p52, %p53
    %s55 = ssub.s32 %s17, %s24
    %p56 = scmp.eq.s32.totalorder %s55, 0
    %s58 = sadd.s32 %s57, 1
    %s59 = scalar_select %p56, %s57, %s58
    %p62 = pneg %p56
    %p63 = scmp.eq.s32.totalorder %s9, 1
    %p64 = por %p62, %p63
    %p65 = scmp.ne.s32.totalorder %s57, %s60
    %p66 = scmp.eq.s32.totalorder %s9, 0
    %p67 = por %p65, %p66
    %p68 = scmp.ne.s32.totalorder %s57, %s60
    %p69 = scmp.eq.s32.totalorder %s14, 1
    %p70 = por %p68, %p69
    %p71 = scmp.ne.s32.totalorder %s60, %s61
    %p72 = scmp.eq.s32.totalorder %s14, 0
    %p73 = por %p71, %p72
    %p74 = scmp.ne.s32.totalorder %s60, %s61
    %p75 = scmp.eq.s32.totalorder %s15, 1
    %p76 = por %p74, %p75
    %p78 = scmp.ne.s32.totalorder %s61, %s77
    %p79 = scmp.eq.s32.totalorder %s15, 0
    %p80 = por %p78, %p79
    %s81 = ssub.s32 %s17, %s24
    %p82 = scmp.eq.s32.totalorder %s81, 0
    %s84 = sadd.s32 %s83, 1
    %s85 = scalar_select %p82, %s83, %s84
    %p88 = pneg %p82
    %p89 = scmp.eq.s32.totalorder %s9, 1
    %p90 = por %p88, %p89
    %p91 = scmp.ne.s32.totalorder %s83, %s86
    %p92 = scmp.eq.s32.totalorder %s9, 0
    %p93 = por %p91, %p92
    %p94 = scmp.ne.s32.totalorder %s83, %s86
    %p95 = scmp.eq.s32.totalorder %s14, 1
    %p96 = por %p94, %p95
    %p97 = scmp.ne.s32.totalorder %s86, %s87
    %p98 = scmp.eq.s32.totalorder %s14, 0
    %p99 = por %p97, %p98
    %p100 = scmp.ne.s32.totalorder %s86, %s87
    %p101 = scmp.eq.s32.totalorder %s15, 1
    %p102 = por %p100, %p101
    %p104 = scmp.ne.s32.totalorder %s87, %s103
    %p105 = scmp.eq.s32.totalorder %s15, 0
    %p106 = por %p104, %p105
    %s107 = ssub.s32 %s16, %s28
    %s108 = ssub.s32 %s17, %s24
    %s109 = sor.u32 %s107, %s108
    %p110 = scmp.eq.s32.totalorder %s109, 0
    %s112 = sadd.s32 %s111, 1
    %s113 = scalar_select %p110, %s111, %s112
    %p116 = pneg %p110
    %p117 = scmp.eq.s32.totalorder %s9, 1
    %p118 = por %p116, %p117
    %p119 = scmp.ne.s32.totalorder %s111, %s114
    %p120 = scmp.eq.s32.totalorder %s9, 0
    %p121 = por %p119, %p120
    %p122 = scmp.ne.s32.totalorder %s111, %s114
    %p123 = scmp.eq.s32.totalorder %s14, 1
    %p124 = por %p122, %p123
    %p125 = scmp.ne.s32.totalorder %s114, %s115
    %p126 = scmp.eq.s32.totalorder %s14, 0
    %p127 = por %p125, %p126
    %p128 = scmp.ne.s32.totalorder %s114, %s115
    %p129 = scmp.eq.s32.totalorder %s15, 1
    %p130 = por %p128, %p129
    %p132 = scmp.ne.s32.totalorder %s115, %s131
    %p133 = scmp.eq.s32.totalorder %s15, 0
    %p134 = por %p132, %p133
    %p135 = scmp.le.s32.totalorder 1, %s9
    %p136 = scmp.lt.s32.totalorder %s9, 3
    %p137 = pnand %p135, %p136
    %p138 = pneg %p137
    // Predicated region
    $region9: #{basic_conv_forward.1} parent=5 // pred_check
      _
    $region10: #{basic_conv_forward.1} parent=5 // pred_check_branch
      %140 = sbr.rel (%p137) target = $region12
    $region11: #{basic_conv_forward.1} parent=5 // pred_region
      %s141 = ssub.s32 %s9, 1
      // Predicated region
      $region13: #{basic_conv_forward.1} parent=11 // pred_check
        %p142 = pneg %p73
      $region14: #{basic_conv_forward.1} parent=11 // pred_check_branch
        %144 = sbr.rel (%p142) target = $region16
      $region15: #{basic_conv_forward.1} parent=11 // pred_region
        %p145 = scmp.lt.s32.totalorder %s19, 0
        %s146 = scalar_select %p145, %s19, 0
        %s147 = smul.addr %s146, 4
        %s148 = scalar_lea.vmem %s1, %s147
      $region16: #{basic_conv_forward.1} parent=11 // pred_fallthru
        _
      // Predicated region
      $region17: #{basic_conv_forward.1} parent=11 // pred_check
        %p149 = pneg %p99
      $region18: #{basic_conv_forward.1} parent=11 // pred_check_branch
        %151 = sbr.rel (%p149) target = $region20
      $region19: #{basic_conv_forward.1} parent=11 // pred_region
        %p152 = scmp.lt.s32.totalorder %s19, 0
        %s153 = scalar_select %p152, %s19, 0
        %s154 = scalar_lea.vmem %s2, %s153
      $region20: #{basic_conv_forward.1} parent=11 // pred_fallthru
        _
    $region12: #{basic_conv_forward.1} parent=5 // pred_fallthru
      _
    %p155 = scmp.lt.s32.totalorder %s9, 2
    // Predicated region
    $region21: #{basic_conv_forward.1} parent=5 // pred_check
      %p156 = pneg %p155
    $region22: #{basic_conv_forward.1} parent=5 // pred_check_branch
      %158 = sbr.rel (%p156) target = $region24
    $region23: #{basic_conv_forward.1} parent=5 // pred_region
      // Predicated region
      $region25: #{basic_conv_forward.1} parent=23 // pred_check
        %p159 = pneg %p41
      $region26: #{basic_conv_forward.1} parent=23 // pred_check_branch
        %161 = sbr.rel (%p159) target = $region28
      $region27: #{basic_conv_forward.1} parent=23 // pred_region
        %s162 = smul.u32 32, %s16
        %p163 = scmp.lt.s32.totalorder %s162, 63
        %s164 = scalar_select %p163, %s162, 63
        %s165 = smul.addr %s164, 4
        %s166 = scalar_lea.vmem %s0, %s165
        %s167 = smul.u32 32, %s16
      $region28: #{basic_conv_forward.1} parent=23 // pred_fallthru
        _
    $region24: #{basic_conv_forward.1} parent=5 // pred_fallthru
      _
    %p168 = scmp.le.s32.totalorder 1, %s9
    %p169 = scmp.lt.s32.totalorder %s9, 3
    %p170 = pnand %p168, %p169
    %p171 = pneg %p170
    // Predicated region
    $region29: #{basic_conv_forward.1} parent=5 // pred_check
      _
    $region30: #{basic_conv_forward.1} parent=5 // pred_check_branch
      %173 = sbr.rel (%p170) target = $region32
    $region31: #{basic_conv_forward.1} parent=5 // pred_region
      %s174 = ssub.s32 %s9, 1
      %s175 = smul.u32 32, %s18
      %p176 = scmp.lt.s32.totalorder %s175, 63
      %s177 = scalar_select %p176, %s175, 63
      %s178 = smul.addr %s177, 4
      %s179 = scalar_lea.vmem %s0, %s178
      %p180 = pneg %p47
      %p181 = pneg %p44
      %p182 = scmp.lt.s32.totalorder %s19, 0
      %s183 = scalar_select %p182, %s19, 0
      %s184 = smul.addr %s183, 4
      %s185 = scalar_lea.vmem %s1, %s184
      %p186 = pneg %p73
      %p187 = pneg %p70
      %p188 = scmp.lt.s32.totalorder %s19, 0
      %s189 = scalar_select %p188, %s19, 0
      %s190 = scalar_lea.vmem %s2, %s189
      %p191 = pneg %p99
      %p192 = pneg %p96
      %p193 = pneg %p127
      %p194 = pneg %p124
      %s195 = smul.u32 32, %s18
      %p196 = scmp.lt.s32.totalorder %s195, 63
      %s197 = scalar_select %p196, %s195, 63
      %p198 = scmp.lt.s32.totalorder %s19, 0
      %s199 = scalar_select %p198, %s19, 0
      %s200 = sadd.s32 %s199, %s197
      %s201 = smul.addr %s200, 4
      %s202 = scalar_lea.vmem %s3, %s201
      %s203 = smul.u32 32, %s18
      %p204 = scmp.lt.s32.totalorder %s203, 63
      %s205 = scalar_select %p204, %s203, 63
      %s206 = smul.addr %s205, 4
      %s207 = scalar_lea.vmem %s0, %s206
      %s208 = smul.u32 32, %s18
      %p209 = scmp.lt.s32.totalorder %s19, 0
      %s210 = scalar_select %p209, %s19, 0
      %s211 = smul.addr %s210, 4
      %s212 = scalar_lea.vmem %s1, %s211
      %p213 = scmp.lt.s32.totalorder %s19, 0
      %s214 = scalar_select %p213, %s19, 0
      %s215 = scalar_lea.vmem %s2, %s214
      %s216 = smul.u32 32, %s18
      %p217 = scmp.lt.s32.totalorder %s216, 63
      %s218 = scalar_select %p217, %s216, 63
      %p219 = scmp.lt.s32.totalorder %s19, 0
      %s220 = scalar_select %p219, %s19, 0
      %s221 = sadd.s32 %s220, %s218
      %s222 = smul.addr %s221, 4
      %s223 = scalar_lea.vmem %s3, %s222
      %s224 = smul.u32 32, %s18
      %v226 = vld [vmem:[%s207] sm:$0xf]
      %v227 = vld [vmem:[%s207 + $0x4] sm:$0xf]
      %v228 = vld [vmem:[%s207 + $0x8] sm:$0xf]
      %v229 = vld [vmem:[%s207 + $0xc] sm:$0xf]
      %v230 = vld [vmem:[%s207 + $0x10] sm:$0xf]
      %v231 = vld [vmem:[%s207 + $0x14] sm:$0xf]
      %v232 = vld [vmem:[%s207 + $0x18] sm:$0xf]
      %v233 = vld [vmem:[%s207 + $0x1c] sm:$0xf]
      %v234 = vld [vmem:[%s207 + $0x20] sm:$0xf]
      %v235 = vld [vmem:[%s207 + $0x24] sm:$0xf]
      %v236 = vld [vmem:[%s207 + $0x28] sm:$0xf]
      %v237 = vld [vmem:[%s207 + $0x2c] sm:$0xf]
      %v238 = vld [vmem:[%s207 + $0x30] sm:$0xf]
      %v239 = vld [vmem:[%s207 + $0x34] sm:$0xf]
      %v240 = vld [vmem:[%s207 + $0x38] sm:$0xf]
      %v241 = vld [vmem:[%s207 + $0x3c] sm:$0xf]
      %v242 = vld [vmem:[%s207 + $0x40] sm:$0xf]
      %v243 = vld [vmem:[%s207 + $0x44] sm:$0xf]
      %v244 = vld [vmem:[%s207 + $0x48] sm:$0xf]
      %v245 = vld [vmem:[%s207 + $0x4c] sm:$0xf]
      %v246 = vld [vmem:[%s207 + $0x50] sm:$0xf]
      %v247 = vld [vmem:[%s207 + $0x54] sm:$0xf]
      %v248 = vld [vmem:[%s207 + $0x58] sm:$0xf]
      %v249 = vld [vmem:[%s207 + $0x5c] sm:$0xf]
      %v250 = vld [vmem:[%s207 + $0x60] sm:$0xf]
      %v251 = vld [vmem:[%s207 + $0x64] sm:$0xf]
      %v252 = vld [vmem:[%s207 + $0x68] sm:$0xf]
      %v253 = vld [vmem:[%s207 + $0x6c] sm:$0xf]
      %v254 = vld [vmem:[%s207 + $0x70] sm:$0xf]
      %v255 = vld [vmem:[%s207 + $0x74] sm:$0xf]
      %v256 = vld [vmem:[%s207 + $0x78] sm:$0xf]
      %v257 = vld [vmem:[%s207 + $0x7c] sm:$0xf]
      %v258 = vld [vmem:[%s212] sm:$0xf]
      %v259 = vld [vmem:[%s212 + $0x4] sm:$0xf]
      %v260 = vld [vmem:[%s212 + $0x8] sm:$0xf]
      %v261 = vld [vmem:[%s212 + $0xc] sm:$0xf]
      %v262 = vld [vmem:[%s212 + $0x10] sm:$0xf]
      %v263 = vld [vmem:[%s212 + $0x14] sm:$0xf]
      %v264 = vld [vmem:[%s215] sm:$0x1]
      %v266 = vlaneseq
      %v267 = vshrl.u32 %v266, 7
      %v268 = vsub.s32 0, %v267
      %v269 = vrot.slane %v264, %v268
      %v303 = vunpack.c.l.b16 %v226
      %v304 = vunpack.c.l.b16 %v227
      %v305 = vunpack.c.l.b16 %v228
      %v306 = vunpack.c.l.b16 %v229
      %v307 = vunpack.c.l.b16 %v230
      %v308 = vunpack.c.l.b16 %v231
      %v309 = vunpack.c.l.b16 %v232
      %v310 = vunpack.c.l.b16 %v233
      %v311 = vunpack.c.l.b16 %v234
      %v312 = vunpack.c.l.b16 %v235
      %v313 = vunpack.c.l.b16 %v236
      %v314 = vunpack.c.l.b16 %v237
      %v315 = vunpack.c.l.b16 %v238
      %v316 = vunpack.c.l.b16 %v239
      %v317 = vunpack.c.l.b16 %v240
      %v318 = vunpack.c.l.b16 %v241
      %v319 = vunpack.c.l.b16 %v242
      %v320 = vunpack.c.l.b16 %v243
      %v321 = vunpack.c.l.b16 %v244
      %v322 = vunpack.c.l.b16 %v245
      %v323 = vunpack.c.l.b16 %v246
      %v324 = vunpack.c.l.b16 %v247
      %v325 = vunpack.c.l.b16 %v248
      %v326 = vunpack.c.l.b16 %v249
      %v327 = vunpack.c.l.b16 %v250
      %v328 = vunpack.c.l.b16 %v251
      %v329 = vunpack.c.l.b16 %v252
      %v330 = vunpack.c.l.b16 %v253
      %v331 = vunpack.c.l.b16 %v254
      %v332 = vunpack.c.l.b16 %v255
      %v333 = vunpack.c.l.b16 %v256
      %v334 = vunpack.c.l.b16 %v257
      %v335 = vpack.c.b16 %v304, %v303
      %v336 = vpack.c.b16 %v306, %v305
      %v337 = vpack.c.b16 %v308, %v307
      %v338 = vpack.c.b16 %v310, %v309
      %v339 = vpack.c.b16 %v312, %v311
      %v340 = vpack.c.b16 %v314, %v313
      %v341 = vpack.c.b16 %v316, %v315
      %v342 = vpack.c.b16 %v318, %v317
      %v343 = vpack.c.b16 %v320, %v319
      %v344 = vpack.c.b16 %v322, %v321
      %v345 = vpack.c.b16 %v324, %v323
      %v346 = vpack.c.b16 %v326, %v325
      %v347 = vpack.c.b16 %v328, %v327
      %v348 = vpack.c.b16 %v330, %v329
      %v349 = vpack.c.b16 %v332, %v331
      %v350 = vpack.c.b16 %v334, %v333
      %v357 = vunpack.c.l.b16 %v258
      %v358 = vunpack.c.l.b16 %v259
      %v359 = vunpack.c.l.b16 %v260
      %v360 = vunpack.c.l.b16 %v261
      %v361 = vunpack.c.l.b16 %v262
      %v362 = vunpack.c.l.b16 %v263
      %v363 = vpack.c.b16 %v358, %v357
      %v364 = vpack.c.b16 %v360, %v359
      %v365 = vpack.c.b16 %v362, %v361
      %vm369 = vcmask 392192
      %v371 = vsel %vm369, %v335, 0
      %v374 = vsel %vm369, %v336, 0
      %v377 = vsel %vm369, %v337, 0
      %v380 = vsel %vm369, %v338, 0
      %v383 = vsel %vm369, %v339, 0
      %v386 = vsel %vm369, %v340, 0
      %v389 = vsel %vm369, %v341, 0
      %v392 = vsel %vm369, %v342, 0
      %v395 = vsel %vm369, %v343, 0
      %v398 = vsel %vm369, %v344, 0
      %v401 = vsel %vm369, %v345, 0
      %v404 = vsel %vm369, %v346, 0
      %v407 = vsel %vm369, %v347, 0
      %v410 = vsel %vm369, %v348, 0
      %v413 = vsel %vm369, %v349, 0
      %v416 = vsel %vm369, %v350, 0
      %418 = vmatprep.subr.bf16.mxu0 0
      %419 = vmatpush1.bf16.msra.mxu0 0
      %420 = vmatprep.subr.bf16.mxu0 0
      %421 = vmatpush1.bf16.msra.mxu0 0
      %422 = vmatprep.subr.bf16.mxu0 0
      %423 = vmatpush1.bf16.msra.mxu0 0
      %424 = vmatprep.subr.bf16.mxu0 0
      %425 = vmatpush1.bf16.msra.mxu0 0
      %426 = vmatprep.subr.bf16.mxu0 0
      %427 = vmatpush1.bf16.msra.mxu0 0
      %428 = vmatprep.subr.bf16.mxu0 0
      %429 = vmatpush1.bf16.msra.mxu0 %v365
      %430 = vmatprep.subr.bf16.mxu0 0
      %431 = vmatpush1.bf16.msra.mxu0 %v364
      %432 = vmatprep.subr.bf16.mxu0 0
      %433 = vmatpush1.bf16.msra.mxu0 %v363
      %434 = vmatprep.subr.bf16.mxu0 0
      %435 = vmatpush2.bf16.msra.mxu0 0
      %436 = vmatprep.subr.bf16.mxu0 0
      %437 = vmatpush2.bf16.msra.mxu0 0
      %438 = vmatprep.subr.bf16.mxu0 0
      %439 = vmatpush2.bf16.msra.mxu0 0
      %440 = vmatprep.subr.bf16.mxu0 0
      %441 = vmatpush2.bf16.msra.mxu0 0
      %442 = vmatprep.subr.bf16.mxu0 0
      %443 = vmatpush2.bf16.msra.mxu0 0
      %444 = vmatprep.subr.bf16.mxu0 0
      %445 = vmatpush2.bf16.msra.mxu0 0
      %446 = vmatprep.subr.bf16.mxu0 0
      %447 = vmatpush2.bf16.msra.mxu0 0
      %448 = vmatprep.subr.bf16.mxu0 0
      %449 = vmatpush2.bf16.msra.mxu0 0
      %450 = vmatprep.mubr.bf16.mxu0 0
      %451 = vmatmul.mubr.bf16.gmra.mxu0 %v371
      %v452 = vpop.f32.mrf.mxu0
      %v453 = vadd.f32 %v269, %v452
      %v454 = vpop.f32.mrf.mxu0
      %v455 = vpop.f32.mrf.mxu0
      %v456 = vadd.f32 %v269, %v455
      %v457 = vpop.f32.mrf.mxu0
      %458 = vmatprep.mubr.bf16.mxu0 0
      %459 = vmatmul.mubr.bf16.gmra.mxu0 %v374
      %v460 = vpop.f32.mrf.mxu0
      %v461 = vadd.f32 %v269, %v460
      %v462 = vpop.f32.mrf.mxu0
      %v463 = vpop.f32.mrf.mxu0
      %v464 = vadd.f32 %v269, %v463
      %v465 = vpop.f32.mrf.mxu0
      %466 = vmatprep.mubr.bf16.mxu0 0
      %467 = vmatmul.mubr.bf16.gmra.mxu0 %v377
      %v468 = vpop.f32.mrf.mxu0
      %v469 = vadd.f32 %v269, %v468
      %v470 = vpop.f32.mrf.mxu0
      %v471 = vpop.f32.mrf.mxu0
      %v472 = vadd.f32 %v269, %v471
      %v473 = vpop.f32.mrf.mxu0
      %474 = vmatprep.mubr.bf16.mxu0 0
      %475 = vmatmul.mubr.bf16.gmra.mxu0 %v380
      %v476 = vpop.f32.mrf.mxu0
      %v477 = vadd.f32 %v269, %v476
      %v478 = vpop.f32.mrf.mxu0
      %v479 = vpop.f32.mrf.mxu0
      %v480 = vadd.f32 %v269, %v479
      %v481 = vpop.f32.mrf.mxu0
      %482 = vmatprep.mubr.bf16.mxu0 0
      %483 = vmatmul.mubr.bf16.gmra.mxu0 %v383
      %v484 = vpop.f32.mrf.mxu0
      %v485 = vadd.f32 %v269, %v484
      %v486 = vpop.f32.mrf.mxu0
      %v487 = vpop.f32.mrf.mxu0
      %v488 = vadd.f32 %v269, %v487
      %v489 = vpop.f32.mrf.mxu0
      %490 = vmatprep.mubr.bf16.mxu0 0
      %491 = vmatmul.mubr.bf16.gmra.mxu0 %v386
      %v492 = vpop.f32.mrf.mxu0
      %v493 = vadd.f32 %v269, %v492
      %v494 = vpop.f32.mrf.mxu0
      %v495 = vpop.f32.mrf.mxu0
      %v496 = vadd.f32 %v269, %v495
      %v497 = vpop.f32.mrf.mxu0
      %498 = vmatprep.mubr.bf16.mxu0 0
      %499 = vmatmul.mubr.bf16.gmra.mxu0 %v389
      %v500 = vpop.f32.mrf.mxu0
      %v501 = vadd.f32 %v269, %v500
      %v502 = vpop.f32.mrf.mxu0
      %v503 = vpop.f32.mrf.mxu0
      %v504 = vadd.f32 %v269, %v503
      %v505 = vpop.f32.mrf.mxu0
      %506 = vmatprep.mubr.bf16.mxu0 0
      %507 = vmatmul.mubr.bf16.gmra.mxu0 %v392
      %v508 = vpop.f32.mrf.mxu0
      %v509 = vadd.f32 %v269, %v508
      %v510 = vpop.f32.mrf.mxu0
      %v511 = vpop.f32.mrf.mxu0
      %v512 = vadd.f32 %v269, %v511
      %v513 = vpop.f32.mrf.mxu0
      %514 = vmatprep.mubr.bf16.mxu0 0
      %515 = vmatmul.mubr.bf16.gmra.mxu0 %v395
      %v516 = vpop.f32.mrf.mxu0
      %v517 = vadd.f32 %v269, %v516
      %v518 = vpop.f32.mrf.mxu0
      %v519 = vpop.f32.mrf.mxu0
      %v520 = vadd.f32 %v269, %v519
      %v521 = vpop.f32.mrf.mxu0
      %522 = vmatprep.mubr.bf16.mxu0 0
      %523 = vmatmul.mubr.bf16.gmra.mxu0 %v398
      %v524 = vpop.f32.mrf.mxu0
      %v525 = vadd.f32 %v269, %v524
      %v526 = vpop.f32.mrf.mxu0
      %v527 = vpop.f32.mrf.mxu0
      %v528 = vadd.f32 %v269, %v527
      %v529 = vpop.f32.mrf.mxu0
      %530 = vmatprep.mubr.bf16.mxu0 0
      %531 = vmatmul.mubr.bf16.gmra.mxu0 %v401
      %v532 = vpop.f32.mrf.mxu0
      %v533 = vadd.f32 %v269, %v532
      %v534 = vpop.f32.mrf.mxu0
      %v535 = vpop.f32.mrf.mxu0
      %v536 = vadd.f32 %v269, %v535
      %v537 = vpop.f32.mrf.mxu0
      %538 = vmatprep.mubr.bf16.mxu0 0
      %539 = vmatmul.mubr.bf16.gmra.mxu0 %v404
      %v540 = vpop.f32.mrf.mxu0
      %v541 = vadd.f32 %v269, %v540
      %v542 = vpop.f32.mrf.mxu0
      %v543 = vpop.f32.mrf.mxu0
      %v544 = vadd.f32 %v269, %v543
      %v545 = vpop.f32.mrf.mxu0
      %546 = vmatprep.mubr.bf16.mxu0 0
      %547 = vmatmul.mubr.bf16.gmra.mxu0 %v407
      %v548 = vpop.f32.mrf.mxu0
      %v549 = vadd.f32 %v269, %v548
      %v550 = vpop.f32.mrf.mxu0
      %v551 = vpop.f32.mrf.mxu0
      %v552 = vadd.f32 %v269, %v551
      %v553 = vpop.f32.mrf.mxu0
      %554 = vmatprep.mubr.bf16.mxu0 0
      %555 = vmatmul.mubr.bf16.gmra.mxu0 %v410
      %v556 = vpop.f32.mrf.mxu0
      %v557 = vadd.f32 %v269, %v556
      %v558 = vpop.f32.mrf.mxu0
      %v559 = vpop.f32.mrf.mxu0
      %v560 = vadd.f32 %v269, %v559
      %v561 = vpop.f32.mrf.mxu0
      %562 = vmatprep.mubr.bf16.mxu0 0
      %563 = vmatmul.mubr.bf16.gmra.mxu0 %v413
      %v564 = vpop.f32.mrf.mxu0
      %v565 = vadd.f32 %v269, %v564
      %v566 = vpop.f32.mrf.mxu0
      %v567 = vpop.f32.mrf.mxu0
      %v568 = vadd.f32 %v269, %v567
      %v569 = vpop.f32.mrf.mxu0
      %570 = vmatprep.mubr.bf16.mxu0 0
      %571 = vmatmul.mubr.bf16.gmra.mxu0 %v416
      %v572 = vpop.f32.mrf.mxu0
      %v573 = vadd.f32 %v269, %v572
      %v574 = vpop.f32.mrf.mxu0
      %v575 = vpop.f32.mrf.mxu0
      %v576 = vadd.f32 %v269, %v575
      %v577 = vpop.f32.mrf.mxu0
      %578 = vdwg.mxu0
      %v579 = vmax.f32 %v453, 0.0
      %v580 = vmax.f32 %v456, 0.0
      %v581 = vmax.f32 %v461, 0.0
      %v582 = vmax.f32 %v464, 0.0
      %v583 = vmax.f32 %v469, 0.0
      %v584 = vmax.f32 %v472, 0.0
      %v585 = vmax.f32 %v477, 0.0
      %v586 = vmax.f32 %v480, 0.0
      %v587 = vmax.f32 %v485, 0.0
      %v588 = vmax.f32 %v488, 0.0
      %v589 = vmax.f32 %v493, 0.0
      %v590 = vmax.f32 %v496, 0.0
      %v591 = vmax.f32 %v501, 0.0
      %v592 = vmax.f32 %v504, 0.0
      %v593 = vmax.f32 %v509, 0.0
      %v594 = vmax.f32 %v512, 0.0
      %v595 = vmax.f32 %v517, 0.0
      %v596 = vmax.f32 %v520, 0.0
      %v597 = vmax.f32 %v525, 0.0
      %v598 = vmax.f32 %v528, 0.0
      %v599 = vmax.f32 %v533, 0.0
      %v600 = vmax.f32 %v536, 0.0
      %v601 = vmax.f32 %v541, 0.0
      %v602 = vmax.f32 %v544, 0.0
      %v603 = vmax.f32 %v549, 0.0
      %v604 = vmax.f32 %v552, 0.0
      %v605 = vmax.f32 %v557, 0.0
      %v606 = vmax.f32 %v560, 0.0
      %v607 = vmax.f32 %v565, 0.0
      %v608 = vmax.f32 %v568, 0.0
      %v609 = vmax.f32 %v573, 0.0
      %v610 = vmax.f32 %v576, 0.0
      %v611 = vpack.c.bf16 %v580, %v579
      %v612 = vpack.c.bf16 %v582, %v581
      %v613 = vpack.c.bf16 %v584, %v583
      %v614 = vpack.c.bf16 %v586, %v585
      %v615 = vpack.c.bf16 %v588, %v587
      %v616 = vpack.c.bf16 %v590, %v589
      %v617 = vpack.c.bf16 %v592, %v591
      %v618 = vpack.c.bf16 %v594, %v593
      %v619 = vpack.c.bf16 %v596, %v595
      %v620 = vpack.c.bf16 %v598, %v597
      %v621 = vpack.c.bf16 %v600, %v599
      %v622 = vpack.c.bf16 %v602, %v601
      %v623 = vpack.c.bf16 %v604, %v603
      %v624 = vpack.c.bf16 %v606, %v605
      %v625 = vpack.c.bf16 %v608, %v607
      %v626 = vpack.c.bf16 %v610, %v609
      %v643 = vunpack.c.l.b16 %v611
      %v644 = vunpack.c.h.b16 %v611
      %v645 = vunpack.c.l.b16 %v612
      %v646 = vunpack.c.h.b16 %v612
      %v647 = vunpack.c.l.b16 %v613
      %v648 = vunpack.c.h.b16 %v613
      %v649 = vunpack.c.l.b16 %v614
      %v650 = vunpack.c.h.b16 %v614
      %v651 = vunpack.c.l.b16 %v615
      %v652 = vunpack.c.h.b16 %v615
      %v653 = vunpack.c.l.b16 %v616
      %v654 = vunpack.c.h.b16 %v616
      %v655 = vunpack.c.l.b16 %v617
      %v656 = vunpack.c.h.b16 %v617
      %v657 = vunpack.c.l.b16 %v618
      %v658 = vunpack.c.h.b16 %v618
      %v659 = vunpack.c.l.b16 %v619
      %v660 = vunpack.c.h.b16 %v619
      %v661 = vunpack.c.l.b16 %v620
      %v662 = vunpack.c.h.b16 %v620
      %v663 = vunpack.c.l.b16 %v621
      %v664 = vunpack.c.h.b16 %v621
      %v665 = vunpack.c.l.b16 %v622
      %v666 = vunpack.c.h.b16 %v622
      %v667 = vunpack.c.l.b16 %v623
      %v668 = vunpack.c.h.b16 %v623
      %v669 = vunpack.c.l.b16 %v624
      %v670 = vunpack.c.h.b16 %v624
      %v671 = vunpack.c.l.b16 %v625
      %v672 = vunpack.c.h.b16 %v625
      %v673 = vunpack.c.l.b16 %v626
      %v674 = vunpack.c.h.b16 %v626
      %v675 = vpack.c.b16 %v643, %v643
      %v676 = vpack.c.b16 %v644, %v644
      %v677 = vpack.c.b16 %v645, %v645
      %v678 = vpack.c.b16 %v646, %v646
      %v679 = vpack.c.b16 %v647, %v647
      %v680 = vpack.c.b16 %v648, %v648
      %v681 = vpack.c.b16 %v649, %v649
      %v682 = vpack.c.b16 %v650, %v650
      %v683 = vpack.c.b16 %v651, %v651
      %v684 = vpack.c.b16 %v652, %v652
      %v685 = vpack.c.b16 %v653, %v653
      %v686 = vpack.c.b16 %v654, %v654
      %v687 = vpack.c.b16 %v655, %v655
      %v688 = vpack.c.b16 %v656, %v656
      %v689 = vpack.c.b16 %v657, %v657
      %v690 = vpack.c.b16 %v658, %v658
      %v691 = vpack.c.b16 %v659, %v659
      %v692 = vpack.c.b16 %v660, %v660
      %v693 = vpack.c.b16 %v661, %v661
      %v694 = vpack.c.b16 %v662, %v662
      %v695 = vpack.c.b16 %v663, %v663
      %v696 = vpack.c.b16 %v664, %v664
      %v697 = vpack.c.b16 %v665, %v665
      %v698 = vpack.c.b16 %v666, %v666
      %v699 = vpack.c.b16 %v667, %v667
      %v700 = vpack.c.b16 %v668, %v668
      %v701 = vpack.c.b16 %v669, %v669
      %v702 = vpack.c.b16 %v670, %v670
      %v703 = vpack.c.b16 %v671, %v671
      %v704 = vpack.c.b16 %v672, %v672
      %v705 = vpack.c.b16 %v673, %v673
      %v706 = vpack.c.b16 %v674, %v674
      %739 = vst [vmem:[%s223] sm:$0xf] %v675
      %740 = vst [vmem:[%s223 + $0x4] sm:$0xf] %v676
      %741 = vst [vmem:[%s223 + $0x8] sm:$0xf] %v677
      %742 = vst [vmem:[%s223 + $0xc] sm:$0xf] %v678
      %743 = vst [vmem:[%s223 + $0x10] sm:$0xf] %v679
      %744 = vst [vmem:[%s223 + $0x14] sm:$0xf] %v680
      %745 = vst [vmem:[%s223 + $0x18] sm:$0xf] %v681
      %746 = vst [vmem:[%s223 + $0x1c] sm:$0xf] %v682
      %747 = vst [vmem:[%s223 + $0x20] sm:$0xf] %v683
      %748 = vst [vmem:[%s223 + $0x24] sm:$0xf] %v684
      %749 = vst [vmem:[%s223 + $0x28] sm:$0xf] %v685
      %750 = vst [vmem:[%s223 + $0x2c] sm:$0xf] %v686
      %751 = vst [vmem:[%s223 + $0x30] sm:$0xf] %v687
      %752 = vst [vmem:[%s223 + $0x34] sm:$0xf] %v688
      %753 = vst [vmem:[%s223 + $0x38] sm:$0xf] %v689
      %754 = vst [vmem:[%s223 + $0x3c] sm:$0xf] %v690
      %755 = vst [vmem:[%s223 + $0x40] sm:$0xf] %v691
      %756 = vst [vmem:[%s223 + $0x44] sm:$0xf] %v692
      %757 = vst [vmem:[%s223 + $0x48] sm:$0xf] %v693
      %758 = vst [vmem:[%s223 + $0x4c] sm:$0xf] %v694
      %759 = vst [vmem:[%s223 + $0x50] sm:$0xf] %v695
      %760 = vst [vmem:[%s223 + $0x54] sm:$0xf] %v696
      %761 = vst [vmem:[%s223 + $0x58] sm:$0xf] %v697
      %762 = vst [vmem:[%s223 + $0x5c] sm:$0xf] %v698
      %763 = vst [vmem:[%s223 + $0x60] sm:$0xf] %v699
      %764 = vst [vmem:[%s223 + $0x64] sm:$0xf] %v700
      %765 = vst [vmem:[%s223 + $0x68] sm:$0xf] %v701
      %766 = vst [vmem:[%s223 + $0x6c] sm:$0xf] %v702
      %767 = vst [vmem:[%s223 + $0x70] sm:$0xf] %v703
      %768 = vst [vmem:[%s223 + $0x74] sm:$0xf] %v704
      %769 = vst [vmem:[%s223 + $0x78] sm:$0xf] %v705
      %770 = vst [vmem:[%s223 + $0x7c] sm:$0xf] %v706
      %s771 = smul.u32 32, %s18
      %p772 = scmp.lt.s32.totalorder %s771, 63
      %s773 = scalar_select %p772, %s771, 63
      %p774 = scmp.lt.s32.totalorder %s19, 0
      %s775 = scalar_select %p774, %s19, 0
      %s776 = sadd.s32 %s775, %s773
      %s777 = smul.addr %s776, 4
      %s778 = scalar_lea.vmem %s3, %s777
      // Predicated region
      $region33: #{basic_conv_forward.1} parent=31 // pred_check
        %p779 = pneg %p124
      $region34: #{basic_conv_forward.1} parent=31 // pred_check_branch
        %781 = sbr.rel (%p779) target = $region36
      $region35: #{basic_conv_forward.1} parent=31 // pred_region
        %s782 = smul.u32 32, %s18
      $region36: #{basic_conv_forward.1} parent=31 // pred_fallthru
        _
    $region32: #{basic_conv_forward.1} parent=5 // pred_fallthru
      _
    %p783 = scmp.le.s32.totalorder 2, %s9
    // Predicated region
    $region37: #{basic_conv_forward.1} parent=5 // pred_check
      %p784 = pneg %p783
    $region38: #{basic_conv_forward.1} parent=5 // pred_check_branch
      %786 = sbr.rel (%p784) target = $region40
    $region39: #{basic_conv_forward.1} parent=5 // pred_region
      %s787 = ssub.s32 %s9, 2
      // Predicated region
      $region41: #{basic_conv_forward.1} parent=39 // pred_check
        %p788 = pneg %p130
      $region42: #{basic_conv_forward.1} parent=39 // pred_check_branch
        %790 = sbr.rel (%p788) target = $region44
      $region43: #{basic_conv_forward.1} parent=39 // pred_region
        %s791 = smul.u32 32, %s20
        %p792 = scmp.lt.s32.totalorder %s791, 63
        %s793 = scalar_select %p792, %s791, 63
        %p794 = scmp.lt.s32.totalorder %s21, 0
        %s795 = scalar_select %p794, %s21, 0
        %s796 = sadd.s32 %s795, %s793
        %s797 = smul.addr %s796, 4
        %s798 = scalar_lea.vmem %s3, %s797
      $region44: #{basic_conv_forward.1} parent=39 // pred_fallthru
        _
    $region40: #{basic_conv_forward.1} parent=5 // pred_fallthru
      _
  $region6: #{basic_conv_forward.1} parent=0 // loop_footer
    %s13 = sadd.s32 1, %s9
  $region7: #{basic_conv_forward.1} parent=0 // loop_footer_branch
    %8 = sbr.rel target = $region3
  $region8: #{basic_conv_forward.1} parent=0 // loop_exit
    _

</llo_original>
